<compile_context>
chip_gen: v7x
topology: tpu7x:2x2x1
jax: 0.10.0
libtpu: 0.0.40
codegen_flags: <defaults>
</compile_context>

<pallas_src>
import functools

import jax
import jax.numpy as jnp
from jax import lax
from jax.experimental import pallas as pl
from jax.experimental.pallas import tpu as pltpu


def _round_up(x, m):
    return (x + m - 1) // m * m


def _cdiv(a, b):
    return -(-a // b)


# --------------------------------------------------------------------------
# Pallas kernel: transposed, tiled GEMM + bias (the conv hot path)
# --------------------------------------------------------------------------
def _conv_gemm_t_kernel(w_ref, a_ref, b_ref, o_ref):
    # w_ref: (OC, K) bf16 weights, a_ref: (K, TM) bf16 patches,
    # b_ref: (OC, 1) f32 bias, o_ref: (OC, TM) f32 output tile.
    acc = jnp.dot(w_ref[...], a_ref[...], preferred_element_type=jnp.float32)
    o_ref[...] = (acc + b_ref[...]).astype(o_ref.dtype)


def _conv_gemm_t(w_t, a_t, b_col, *, tm):
    """w_t: (OC, K), a_t: (K, M_pad), b_col: (OC, 1). Returns (OC, M_pad) f32."""
    OC, K = w_t.shape
    _, M_pad = a_t.shape
    assert M_pad % tm == 0
    grid = (M_pad // tm,)

    bytes_accessed = (
        a_t.size * a_t.dtype.itemsize
        + w_t.size * w_t.dtype.itemsize
        + b_col.size * b_col.dtype.itemsize
        + OC * M_pad * 4
    )
    cost = pl.CostEstimate(
        flops=2 * M_pad * K * OC,
        transcendentals=0,
        bytes_accessed=bytes_accessed,
    )

    return pl.pallas_call(
        _conv_gemm_t_kernel,
        out_shape=jax.ShapeDtypeStruct((OC, M_pad), jnp.float32),
        grid=grid,
        in_specs=[
            pl.BlockSpec((OC, K), lambda i: (0, 0)),   # weights stay resident
            pl.BlockSpec((K, tm), lambda i: (0, i)),   # A^T tile, pipelined over M
            pl.BlockSpec((OC, 1), lambda i: (0, 0)),   # bias stays resident
        ],
        out_specs=pl.BlockSpec((OC, tm), lambda i: (0, i)),
        compiler_params=pltpu.CompilerParams(
            dimension_semantics=("parallel",),          # megacore-shard M on v7x
            vmem_limit_bytes=32 << 20,                  # >> tile footprint, safe on all gens
        ),
        cost_estimate=cost,
    )(w_t, a_t, b_col)


# --------------------------------------------------------------------------
# ConvLayer forward: reflection pad (XLA glue) + conv via transposed Pallas GEMM
# --------------------------------------------------------------------------
@functools.partial(jax.jit, static_argnames=("stride", "compute_dtype"))
def conv_layer_forward(x_nchw, weight, bias, *, stride,
                       compute_dtype=jnp.bfloat16):
    """x_nchw: (N, C, H, W); weight: (OC, IC, kh, kw); bias: (OC,)."""
    N, C, H, W = x_nchw.shape
    OC, IC, kh, kw = weight.shape
    assert C == IC
    ph, pw = kh // 2, kw // 2  # reflection_padding = floor(kernel_size / 2)
    # PyTorch ReflectionPad2d constraint: pad must be < input dim.
    assert ph < H and pw < W, "reflection padding requires pad < spatial dim"

    # ReflectionPad2d (matches PyTorch 'reflect' semantics).
    xp = jnp.pad(x_nchw, ((0, 0), (0, 0), (ph, ph), (pw, pw)), mode="reflect")
    Hp, Wp = H + 2 * ph, W + 2 * pw
    Ho = (Hp - kh) // stride + 1
    Wo = (Wp - kw) // stride + 1
    M = N * Ho * Wo
    K = kh * kw * C

    # Channel-major (C, N, Hp, Wp) bf16 so per-tap slabs flatten directly to
    # (C, M) with M-contiguous rows (lane-dense A^T stream).
    xp_cn = jnp.transpose(xp, (1, 0, 2, 3)).astype(compute_dtype)

    # im2col, transposed: A^T (K, M); K ordered (ki, kj, c), M ordered (n, oh, ow).
    cols = []
    for ki in range(kh):
        for kj in range(kw):
            slab = xp_cn[:, :,
                         ki:ki + (Ho - 1) * stride + 1:stride,
                         kj:kj + (Wo - 1) * stride + 1:stride]   # (C, N, Ho, Wo)
            cols.append(slab.reshape(C, M))
    a_t = jnp.concatenate(cols, axis=0)                          # (K, M)

    # M tiling: lane-dense tm (multiple of 128), large enough to amortize the
    # ~0.35 us per-grid-step overhead, and >= 2 grid steps whenever M allows
    # so both v7x TensorCores get work.
    TM_MAX = 2048
    M128 = _round_up(M, 128)
    nblk = _cdiv(M128, TM_MAX)
    if M128 >= 2 * 128:
        nblk = max(nblk, 2)
    tm = _round_up(_cdiv(M128, nblk), 128)
    M_pad = nblk * tm
    if M_pad != M:
        # Lane-tail pad only (< tm columns); no-op when M % tm == 0.
        a_t = jnp.pad(a_t, ((0, 0), (0, M_pad - M)))

    # W^T (OC, K), K ordered (ki, kj, c); bias as an (OC, 1) column.
    w_t = jnp.transpose(weight, (0, 2, 3, 1)).reshape(OC, K).astype(compute_dtype)
    b_col = bias.astype(jnp.float32).reshape(OC, 1)

    out_t = _conv_gemm_t(w_t, a_t, b_col, tm=tm)     # (OC, M_pad) f32

    # Drop the lane-tail padding, un-flatten M and return NCHW (module contract).
    out = out_t[:, :M].reshape(OC, N, Ho, Wo)
    return jnp.transpose(out, (1, 0, 2, 3))


# --------------------------------------------------------------------------
# Plain-JAX reference (for correctness check)
# --------------------------------------------------------------------------
def conv_layer_reference(x_nchw, weight, bias, *, stride,
                         compute_dtype=jnp.float32):
    ph, pw = weight.shape[2] // 2, weight.shape[3] // 2
    xp = jnp.pad(x_nchw, ((0, 0), (0, 0), (ph, ph), (pw, pw)), mode="reflect")
    out = lax.conv_general_dilated(
        xp.astype(compute_dtype), weight.astype(compute_dtype),
        window_strides=(stride, stride), padding="VALID",
        dimension_numbers=("NCHW", "OIHW", "NCHW"),
        preferred_element_type=jnp.float32)
    return out + bias.astype(jnp.float32).reshape(1, -1, 1, 1)


def _run_case(key, N, IC, H, W, OC, ksize, stride):
    kx, kw_, kb = jax.random.split(key, 3)
    x = jax.random.normal(kx, (N, IC, H, W), dtype=jnp.float32)

    # Deterministic PyTorch-style Conv2d init: U(-1/sqrt(fan_in), 1/sqrt(fan_in))
    fan_in = IC * ksize * ksize
    bound = 1.0 / (float(fan_in) ** 0.5)
    weight = jax.random.uniform(kw_, (OC, IC, ksize, ksize), jnp.float32,
                                -bound, bound)
    bias = jax.random.uniform(kb, (OC,), jnp.float32, -bound, bound)

    out = jax.block_until_ready(conv_layer_forward(x, weight, bias, stride=stride))

    # Like-for-like check: reference with the same bf16 input quantization,
    # f32 accumulation (tight tolerance).
    ref_bf16 = conv_layer_reference(x, weight, bias, stride=stride,
                                    compute_dtype=jnp.bfloat16)
    assert out.shape == ref_bf16.shape, (out.shape, ref_bf16.shape)
    assert jnp.allclose(out, ref_bf16, atol=5e-4, rtol=5e-4), \
        "mismatch vs bf16-quantized reference"

    # Sanity check vs full-f32 reference (bounded bf16 quantization error).
    ref_f32 = conv_layer_reference(x, weight, bias, stride=stride)
    assert jnp.allclose(out, ref_f32, atol=2e-2, rtol=2e-2), \
        "mismatch vs f32 reference beyond bf16 tolerance"


if __name__ == "__main__":
    key = jax.random.PRNGKey(0)
    k1, k2 = jax.random.split(key)

    # ConvLayer(4, 8, kernel_size=3, stride=2) on (2, 4, 16, 16): single-block grid.
    _run_case(k1, N=2, IC=4, H=16, W=16, OC=8, ksize=3, stride=2)
    # ConvLayer(4, 8, kernel_size=3, stride=1): exercises the multi-step M grid.
    _run_case(k2, N=2, IC=4, H=16, W=16, OC=8, ksize=3, stride=1)

    print("KERNEL_OK")
</pallas_src>

<mosaic_0001>
module attributes {stable_mosaic.version = 11 : i64} {
  func.func @_conv_gemm_t_kernel(%arg0: i32, %arg1: memref<8x36xbf16, #tpu.memory_space<vmem>>, %arg2: memref<36x128xbf16, #tpu.memory_space<vmem>>, %arg3: memref<8x1xf32, #tpu.memory_space<vmem>>, %arg4: memref<8x128xf32, #tpu.memory_space<vmem>>) attributes {dimension_semantics = [#tpu.dimension_semantics<parallel>], iteration_bounds = array<i64: 1>, scalar_prefetch = 0 : i64, scratch_operands = 0 : i64, tpu.core_type = #tpu.core_type<tc>, window_params = [{pipeline_mode = #tpu.pipeline_mode<synchronous>, transform_indices = @transform_0, window_bounds = array<i64: 8, 36>}, {transform_indices = @transform_1, window_bounds = array<i64: 36, 128>}, {pipeline_mode = #tpu.pipeline_mode<synchronous>, transform_indices = @transform_2, window_bounds = array<i64: 8, 1>}, {transform_indices = @transform_3, window_bounds = array<i64: 8, 128>}]} {
    %c0 = arith.constant 0 : index
    %c0_0 = arith.constant 0 : index
    %0 = vector.load %arg1[%c0, %c0_0] : memref<8x36xbf16, #tpu.memory_space<vmem>>, vector<8x36xbf16>
    %c0_1 = arith.constant 0 : index
    %c0_2 = arith.constant 0 : index
    %1 = vector.load %arg2[%c0_1, %c0_2] : memref<36x128xbf16, #tpu.memory_space<vmem>>, vector<36x128xbf16>
    %cst = arith.constant dense<0.000000e+00> : vector<8x128xf32>
    %2 = tpu.matmul %0, %1, %cst {dimension_numbers = #tpu.dot_dimension_numbers<[1], [0], [0], [1], [0, 0, 1, 1], [], []>} : vector<8x36xbf16>, vector<36x128xbf16>, vector<8x128xf32> -> vector<8x128xf32>
    %c0_3 = arith.constant 0 : index
    %c0_4 = arith.constant 0 : index
    %3 = vector.load %arg3[%c0_3, %c0_4] : memref<8x1xf32, #tpu.memory_space<vmem>>, vector<8x1xf32>
    %4 = vector.broadcast %3 : vector<8x1xf32> to vector<8x128xf32>
    %5 = arith.addf %2, %4 : vector<8x128xf32>
    %c0_5 = arith.constant 0 : index
    %c0_6 = arith.constant 0 : index
    %6 = vector.load %arg4[%c0_5, %c0_6] : memref<8x128xf32, #tpu.memory_space<vmem>>, vector<8x128xf32>
    tpu.vector_store %arg4[%c0_5, %c0_6], %5 {strides = array<i32>} : memref<8x128xf32, #tpu.memory_space<vmem>>, vector<8x128xf32>,
    return
  }
  func.func @transform_0(%arg0: i32) -> (i32, i32) {
    %c0_i32 = arith.constant 0 : i32
    %c0_i32_0 = arith.constant 0 : i32
    %c0_i32_1 = arith.constant 0 : i32
    return %c0_i32, %c0_i32_0 : i32, i32
  }
  func.func @transform_1(%arg0: i32) -> (i32, i32) {
    %c0_i32 = arith.constant 0 : i32
    %c0_i32_0 = arith.constant 0 : i32
    return %c0_i32, %arg0 : i32, i32
  }
  func.func @transform_2(%arg0: i32) -> (i32, i32) {
    %c0_i32 = arith.constant 0 : i32
    %c0_i32_0 = arith.constant 0 : i32
    %c0_i32_1 = arith.constant 0 : i32
    return %c0_i32, %c0_i32_0 : i32, i32
  }
  func.func @transform_3(%arg0: i32) -> (i32, i32) {
    %c0_i32 = arith.constant 0 : i32
    %c0_i32_0 = arith.constant 0 : i32
    return %c0_i32, %arg0 : i32, i32
  }
}

</mosaic_0001>

<llo_original>
// kernel: conv_layer_forward.1
$region0: #{conv_layer_forward.1}
  #allocation0 [shape = 'u32[]', space=smem, size = 0x4, offset = 0x4, fixed_abs, tag = 'smem constant byte address 0x4 - core index']
  #allocation1 [shape = 'u32[144,128]{1,0:T(1,128)}', space=vmem, size = 0x12000, scoped, tag = 'internal scratch']
  %s0 = inlined_call_operand.vmem [shape: bf16[8,36], index: 0, kind: input, shape index: {}]
  %s1 = inlined_call_operand.vmem [shape: bf16[36,128], index: 1, kind: input, shape index: {}]
  %s2 = inlined_call_operand.vmem [shape: f32[8,1], index: 2, kind: input, shape index: {}]
  %s3 = inlined_call_operand.vmem [shape: f32[8,128], index: 3, kind: output, shape index: {}]
  %s4 = sld [smem:[#allocation0]]
  $region22: #{conv_layer_forward.1} parent=0
    _
  %s6 = ssub.s32 1, %s4
  %s7 = scalar_select 0, %s6, %s4
  // Predicated region
  $region2: #{conv_layer_forward.1} parent=0 // pred_check
    _
  $region3: #{conv_layer_forward.1} parent=0 // pred_check_branch
    %9 = sbr.rel (0) target = $region5
  $region4: #{conv_layer_forward.1} parent=0 // pred_region
    _
  $region5: #{conv_layer_forward.1} parent=0 // pred_fallthru
    _
  // Predicated region
  $region6: #{conv_layer_forward.1} parent=0 // pred_check
    _
  $region7: #{conv_layer_forward.1} parent=0 // pred_check_branch
    %11 = sbr.rel (0) target = $region9
  $region8: #{conv_layer_forward.1} parent=0 // pred_region
    _
  $region9: #{conv_layer_forward.1} parent=0 // pred_fallthru
    _
  // Predicated region
  $region10: #{conv_layer_forward.1} parent=0 // pred_check
    _
  $region11: #{conv_layer_forward.1} parent=0 // pred_check_branch
    %13 = sbr.rel (0) target = $region13
  $region12: #{conv_layer_forward.1} parent=0 // pred_region
    _
  $region13: #{conv_layer_forward.1} parent=0 // pred_fallthru
    _
  %v15 = vld [vmem:[%s0] sm:$0xf]
  %v16 = vld [vmem:[%s1] sm:$0xf]
  %v17 = vld [vmem:[%s1 + $0x4] sm:$0xf]
  %v18 = vld [vmem:[%s1 + $0x8] sm:$0xf]
  %v19 = vld [vmem:[%s1 + $0xc] sm:$0xf]
  %v20 = vld [vmem:[%s1 + $0x10] sm:$0x3]
  %v21 = vld [vmem:[%s2] sm:$0xff]
  %23 = vset.pattern.permute.xlu0 0
  %24 = vperm.xlu0 %23, %v21
  %v25 = vpop.permute.xlu0 %24
  %v32 = vunpack.c.l.b16 %v16
  %v33 = vunpack.c.l.b16 %v17
  %v34 = vunpack.c.l.b16 %v18
  %v35 = vunpack.c.l.b16 %v19
  %v36 = vunpack.c.l.b16 %v20
  %v37 = vpack.c.b16 %v33, %v32
  %v38 = vpack.c.b16 %v35, %v34
  %v39 = vpack.c.b16 %v36, %v36
  %vm42 = vcmask 293888
  %v44 = vsel %vm42, %v15, 0
  %vm46 = vcmask 1041408
  %v48 = vsel %vm46, %v39, 0
  %50 = vmatprep.subr.bf16.mxu0 0
  %51 = vmatpush1.bf16.msra.mxu0 %v37
  %52 = vmatprep.subr.bf16.mxu0 0
  %53 = vmatpush1.bf16.msra.mxu0 %v38
  %54 = vmatprep.subr.bf16.mxu0 0
  %55 = vmatpush1.bf16.msra.mxu0 %v48
  %56 = vmatprep.subr.bf16.mxu0 0
  %57 = vmatpush1.bf16.msra.mxu0 0
  %58 = vmatprep.subr.bf16.mxu0 0
  %59 = vmatpush1.bf16.msra.mxu0 0
  %60 = vmatprep.subr.bf16.mxu0 0
  %61 = vmatpush1.bf16.msra.mxu0 0
  %62 = vmatprep.subr.bf16.mxu0 0
  %63 = vmatpush1.bf16.msra.mxu0 0
  %64 = vmatprep.subr.bf16.mxu0 0
  %65 = vmatpush1.bf16.msra.mxu0 0
  %66 = vmatprep.subr.bf16.mxu0 0
  %67 = vmatpush1.bf16.msra.mxu0 0
  %68 = vmatprep.subr.bf16.mxu0 0
  %69 = vmatpush1.bf16.msra.mxu0 0
  %70 = vmatprep.subr.bf16.mxu0 0
  %71 = vmatpush1.bf16.msra.mxu0 0
  %72 = vmatprep.subr.bf16.mxu0 0
  %73 = vmatpush1.bf16.msra.mxu0 0
  %74 = vmatprep.subr.bf16.mxu0 0
  %75 = vmatpush1.bf16.msra.mxu0 0
  %76 = vmatprep.subr.bf16.mxu0 0
  %77 = vmatpush1.bf16.msra.mxu0 0
  %78 = vmatprep.subr.bf16.mxu0 0
  %79 = vmatpush1.bf16.msra.mxu0 0
  %80 = vmatprep.subr.bf16.mxu0 0
  %81 = vmatpush1.bf16.msra.mxu0 0
  %82 = vmatprep.mubr.bf16.mxu0 0
  %83 = vmatmul.mubr.bf16.gmra.mrb[0].mxu0 %v44
  %v84 = vpop.f32.mrb[0].mxu0
  %v85 = vadd.f32 %v25, %v84
  %v86 = vpop.f32.mrb[0].mxu0
  %v87 = vpop.f32.mrb[0].mxu0
  %v88 = vpop.f32.mrb[0].mxu0
  %89 = vdwg.mxu0
  %90 = vst [vmem:[%s3] sm:$0xff] %v85
  // Predicated region
  $region14: #{conv_layer_forward.1} parent=0 // pred_check
    _
  $region15: #{conv_layer_forward.1} parent=0 // pred_check_branch
    %92 = sbr.rel (0) target = $region17
  $region16: #{conv_layer_forward.1} parent=0 // pred_region
    _
  $region17: #{conv_layer_forward.1} parent=0 // pred_fallthru
    _
  // Predicated region
  $region18: #{conv_layer_forward.1} parent=0 // pred_check
    _
  $region19: #{conv_layer_forward.1} parent=0 // pred_check_branch
    %94 = sbr.rel (0) target = $region21
  $region20: #{conv_layer_forward.1} parent=0 // pred_region
    _
  $region21: #{conv_layer_forward.1} parent=0 // pred_fallthru
    _

</llo_original>
